<compile_context>
chip_gen: v5e
topology: v5e:2x2
jax: 0.10.0
libtpu: 0.0.40
codegen_flags: <defaults>
</compile_context>

<pallas_src>
import jax
import jax.numpy as jnp
from jax.experimental import pallas as pl
from jax.experimental.pallas import tpu as pltpu


def _implicit_a_kernel(x_ref, imp_ref, o_ref):
    # x_ref: (1, C, THW), imp_ref: (1, C, 1) -> lane-broadcast add on the VPU.
    o_ref[...] = x_ref[...] + imp_ref[...]


def _pick_hw_tile(hw, cap=1024):
    """Largest multiple-of-128 divisor of hw that is <= cap; otherwise the full
    extent (full-extent blocks are always legal regardless of (8,128))."""
    if hw <= cap or hw % 128 != 0:
        return hw
    t = cap - (cap % 128)
    while t >= 128:
        if hw % t == 0:
            return t
        t -= 128
    return hw


def implicit_a(x, implicit):
    """Pallas equivalent of ImplicitA.forward: implicit + x.

    x:        (N, C, H, W)
    implicit: (1, C, 1, 1) learned parameter
    """
    N, C, H, W = x.shape
    assert implicit.shape == (1, C, 1, 1), implicit.shape
    hw = H * W
    thw = _pick_hw_tile(hw)

    # Lane-dense layout: last dim = H*W instead of W.
    x3 = x.reshape(N, C, hw)
    imp3 = implicit.astype(x.dtype).reshape(1, C, 1)

    grid = (N, pl.cdiv(hw, thw))

    cost = pl.CostEstimate(
        flops=N * C * hw,
        transcendentals=0,
        bytes_accessed=2 * x.size * x.dtype.itemsize
        + imp3.size * imp3.dtype.itemsize,
    )

    out3 = pl.pallas_call(
        _implicit_a_kernel,
        out_shape=jax.ShapeDtypeStruct((N, C, hw), x.dtype),
        grid=grid,
        in_specs=[
            pl.BlockSpec((1, C, thw), lambda n, j: (n, 0, j)),
            pl.BlockSpec((1, C, 1), lambda n, j: (0, 0, 0)),
        ],
        out_specs=pl.BlockSpec((1, C, thw), lambda n, j: (n, 0, j)),
        compiler_params=pltpu.CompilerParams(
            dimension_semantics=("parallel", "parallel"),
        ),
        cost_estimate=cost,
    )(x3, imp3)

    return out3.reshape(N, C, H, W)


if __name__ == "__main__":
    key = jax.random.PRNGKey(0)
    k_x, k_p = jax.random.split(key)

    N, C, H, W = 2, 4, 16, 16
    x = jax.random.normal(k_x, (N, C, H, W), dtype=jnp.float32)
    # Equivalent of nn.init.normal_(self.implicit, mean=0.0, std=0.02).
    implicit = 0.02 * jax.random.normal(k_p, (1, C, 1, 1), dtype=jnp.float32)

    out = implicit_a(x, implicit)
    out = jax.block_until_ready(out)

    ref = implicit + x
    assert out.shape == ref.shape, (out.shape, ref.shape)
    assert out.dtype == ref.dtype
    assert jnp.allclose(out, ref, rtol=0.0, atol=0.0), "mismatch vs reference"

    print("KERNEL_OK")
</pallas_src>

<mosaic_0001>
module attributes {stable_mosaic.version = 11 : i64} {
  func.func @_implicit_a_kernel(%arg0: i32, %arg1: i32, %arg2: memref<1x4x256xf32, #tpu.memory_space<vmem>>, %arg3: memref<1x4x1xf32, #tpu.memory_space<vmem>>, %arg4: memref<1x4x256xf32, #tpu.memory_space<vmem>>) attributes {dimension_semantics = [#tpu.dimension_semantics<parallel>, #tpu.dimension_semantics<parallel>], iteration_bounds = array<i64: 2, 1>, scalar_prefetch = 0 : i64, scratch_operands = 0 : i64, tpu.core_type = #tpu.core_type<tc>, window_params = [{transform_indices = @transform_0, window_bounds = array<i64: 1, 4, 256>}, {pipeline_mode = #tpu.pipeline_mode<synchronous>, transform_indices = @transform_1, window_bounds = array<i64: 1, 4, 1>}, {transform_indices = @transform_2, window_bounds = array<i64: 1, 4, 256>}]} {
    %c0 = arith.constant 0 : index
    %c0_0 = arith.constant 0 : index
    %c0_1 = arith.constant 0 : index
    %0 = vector.load %arg2[%c0, %c0_0, %c0_1] : memref<1x4x256xf32, #tpu.memory_space<vmem>>, vector<1x4x256xf32>
    %c0_2 = arith.constant 0 : index
    %c0_3 = arith.constant 0 : index
    %c0_4 = arith.constant 0 : index
    %1 = vector.load %arg3[%c0_2, %c0_3, %c0_4] : memref<1x4x1xf32, #tpu.memory_space<vmem>>, vector<1x4x1xf32>
    %2 = vector.broadcast %1 : vector<1x4x1xf32> to vector<1x4x256xf32>
    %3 = arith.addf %0, %2 : vector<1x4x256xf32>
    %c0_5 = arith.constant 0 : index
    %c0_6 = arith.constant 0 : index
    %c0_7 = arith.constant 0 : index
    %4 = vector.load %arg4[%c0_5, %c0_6, %c0_7] : memref<1x4x256xf32, #tpu.memory_space<vmem>>, vector<1x4x256xf32>
    tpu.vector_store %arg4[%c0_5, %c0_6, %c0_7], %3 {strides = array<i32>} : memref<1x4x256xf32, #tpu.memory_space<vmem>>, vector<1x4x256xf32>,
    return
  }
  func.func @transform_0(%arg0: i32, %arg1: i32) -> (i32, i32, i32) {
    %c0_i32 = arith.constant 0 : i32
    %c0_i32_0 = arith.constant 0 : i32
    return %arg0, %c0_i32, %arg1 : i32, i32, i32
  }
  func.func @transform_1(%arg0: i32, %arg1: i32) -> (i32, i32, i32) {
    %c0_i32 = arith.constant 0 : i32
    %c0_i32_0 = arith.constant 0 : i32
    %c0_i32_1 = arith.constant 0 : i32
    %c0_i32_2 = arith.constant 0 : i32
    return %c0_i32, %c0_i32_0, %c0_i32_1 : i32, i32, i32
  }
  func.func @transform_2(%arg0: i32, %arg1: i32) -> (i32, i32, i32) {
    %c0_i32 = arith.constant 0 : i32
    %c0_i32_0 = arith.constant 0 : i32
    return %arg0, %c0_i32, %arg1 : i32, i32, i32
  }
}

</mosaic_0001>

<llo_original>
// kernel: tpu_custom_call.1
$region0: #{tpu_custom_call.1}
  #allocation0 [shape = 'u32[]', space=smem, size = 0x4, offset = 0x4, fixed_abs, tag = 'smem constant byte address 0x4 - core index']
  #allocation1 [shape = 'u32[72,128]{1,0:T(1,128)}', space=vmem, size = 0x9000, scoped, tag = 'internal scratch']
  %s0 = inlined_call_operand.hbm [shape: f32[2,4,256], index: 0, kind: input, shape index: {}]
  %s1 = inlined_call_operand.vmem [shape: f32[1,4,1], index: 1, kind: input, shape index: {}]
  %s2 = inlined_call_operand.hbm [shape: f32[2,4,256], index: 2, kind: output, shape index: {}]
  %s3 = sld [smem:[#allocation0]]
  $region45: #{tpu_custom_call.1} parent=0
    _
  %s5 = ssub.s32 1, %s3
  %s6 = scalar_select 0, %s5, %s3
  $region1: #{tpu_custom_call.1} parent=0
    #allocation2 [shape = 'u8[8192]{0}', space=vmem, size = 0x2000, scoped, tag = 'input window, operand 0']
    #allocation3 [shape = 's32[2]{0}', space=sflag, size = 0x8, scoped, tag = 'scoped memory for tpu_custom_call.1']
    #allocation4 [shape = 's32[2]{0}', space=sflag, size = 0x8, scoped, tag = 'scoped memory for tpu_custom_call.1']
    #allocation5 [shape = 'u8[8192]{0}', space=vmem, size = 0x2000, scoped, tag = 'output window, operand 0']
    %7 = vsyncpa [#allocation3], 0
    %s8 = scalar_lea.sflag [#allocation3], 1
    %9 = vsyncpa %s8, 0
    %10 = vsyncpa [#allocation4], 0
    %s11 = scalar_lea.sflag [#allocation4], 1
    %12 = vsyncpa %s11, 0
    loop: start=0, step=1, limit=4
    $region2: #{tpu_custom_call.1} parent=1 // loop_pre_header
      _
    $region3: #{tpu_custom_call.1} parent=1 // loop_header
      %s14 = sphi 0, %s18
      %p15 = scmp.ge.s32.totalorder %s14, 4
      %s21 = sphi 0, %s33
      %s22 = sphi 0, %s29
      %s23 = sphi 0, %s21
      %s24 = sphi 0, %s22
      %s25 = sphi 0, %s23
      %s26 = sphi 0, %s24
      %s38 = sphi 0, %s40
      %s41 = sphi 0, %s38
      %s42 = sphi 0, %s41
      %s58 = sphi 0, %s42
      %s62 = sphi 0, %s62
      %s64 = sphi 0, %s62
      %s65 = sphi 0, %s64
      %s79 = sphi 0, %s65
      %s87 = sphi 0, %s89
      %s90 = sphi 0, %s87
      %s91 = sphi 0, %s90
      %s107 = sphi 0, %s91
    $region4: #{tpu_custom_call.1} parent=1 // loop_header_branch
      %17 = sbr.rel (%p15) target = $region8
    $region5: #{tpu_custom_call.1} parent=1 // loop_body
      %s19 = ssub.s32 %s14, 1
      %s20 = ssub.s32 %s14, 2
      %s27 = sadd.s32 1, %s22
      %p28 = scmp.ge.s32.totalorder %s27, 1
      %s29 = scalar_select %p28, 0, %s27
      %s30 = sadd.s32 1, %s21
      %s31 = scalar_select %p28, %s30, %s21
      %p32 = scmp.ge.s32.totalorder %s31, 2
      %s33 = scalar_select %p32, 0, %s31
      %s34 = ssub.s32 %s21, %s33
      %s35 = ssub.s32 %s22, %s29
      %s36 = sor.u32 %s34, %s35
      %p37 = scmp.eq.s32.totalorder %s36, 0
      %s39 = sadd.s32 %s38, 1
      %s40 = scalar_select %p37, %s38, %s39
      %p43 = pneg %p37
      %p44 = scmp.eq.s32.totalorder %s14, 1
      %p45 = por %p43, %p44
      %p46 = scmp.ne.s32.totalorder %s38, %s41
      %p47 = scmp.eq.s32.totalorder %s14, 0
      %p48 = por %p46, %p47
      %p49 = scmp.ne.s32.totalorder %s38, %s41
      %p50 = scmp.eq.s32.totalorder %s19, 1
      %p51 = por %p49, %p50
      %p52 = scmp.ne.s32.totalorder %s41, %s42
      %p53 = scmp.eq.s32.totalorder %s19, 0
      %p54 = por %p52, %p53
      %p55 = scmp.ne.s32.totalorder %s41, %s42
      %p56 = scmp.eq.s32.totalorder %s20, 1
      %p57 = por %p55, %p56
      %p59 = scmp.ne.s32.totalorder %s42, %s58
      %p60 = scmp.eq.s32.totalorder %s20, 0
      %p61 = por %p59, %p60
      %s63 = sadd.s32 %s62, 1
      %p66 = scmp.eq.s32.totalorder %s14, 1
      %p67 = scmp.ne.s32.totalorder %s62, %s64
      %p68 = scmp.eq.s32.totalorder %s14, 0
      %p69 = por %p67, %p68
      %p70 = scmp.ne.s32.totalorder %s62, %s64
      %p71 = scmp.eq.s32.totalorder %s19, 1
      %p72 = por %p70, %p71
      %p73 = scmp.ne.s32.totalorder %s64, %s65
      %p74 = scmp.eq.s32.totalorder %s19, 0
      %p75 = por %p73, %p74
      %p76 = scmp.ne.s32.totalorder %s64, %s65
      %p77 = scmp.eq.s32.totalorder %s20, 1
      %p78 = por %p76, %p77
      %p80 = scmp.ne.s32.totalorder %s65, %s79
      %p81 = scmp.eq.s32.totalorder %s20, 0
      %p82 = por %p80, %p81
      %s83 = ssub.s32 %s21, %s33
      %s84 = ssub.s32 %s22, %s29
      %s85 = sor.u32 %s83, %s84
      %p86 = scmp.eq.s32.totalorder %s85, 0
      %s88 = sadd.s32 %s87, 1
      %s89 = scalar_select %p86, %s87, %s88
      %p92 = pneg %p86
      %p93 = scmp.eq.s32.totalorder %s14, 1
      %p94 = por %p92, %p93
      %p95 = scmp.ne.s32.totalorder %s87, %s90
      %p96 = scmp.eq.s32.totalorder %s14, 0
      %p97 = por %p95, %p96
      %p98 = scmp.ne.s32.totalorder %s87, %s90
      %p99 = scmp.eq.s32.totalorder %s19, 1
      %p100 = por %p98, %p99
      %p101 = scmp.ne.s32.totalorder %s90, %s91
      %p102 = scmp.eq.s32.totalorder %s19, 0
      %p103 = por %p101, %p102
      %p104 = scmp.ne.s32.totalorder %s90, %s91
      %p105 = scmp.eq.s32.totalorder %s20, 1
      %p106 = por %p104, %p105
      %p108 = scmp.ne.s32.totalorder %s91, %s107
      %p109 = scmp.eq.s32.totalorder %s20, 0
      %p110 = por %p108, %p109
      %p111 = scmp.le.s32.totalorder 1, %s14
      %p112 = scmp.lt.s32.totalorder %s14, 3
      %p113 = pnand %p111, %p112
      %p114 = pneg %p113
      // Predicated region
      $region9: #{tpu_custom_call.1} parent=5 // pred_check
        _
      $region10: #{tpu_custom_call.1} parent=5 // pred_check_branch
        %116 = sbr.rel (%p113) target = $region12
      $region11: #{tpu_custom_call.1} parent=5 // pred_region
        %s117 = ssub.s32 %s14, 1
        // Predicated region
        $region13: #{tpu_custom_call.1} parent=11 // pred_check
          %p118 = pneg %p75
        $region14: #{tpu_custom_call.1} parent=11 // pred_check_branch
          %120 = sbr.rel (%p118) target = $region16
        $region15: #{tpu_custom_call.1} parent=11 // pred_region
          _
        $region16: #{tpu_custom_call.1} parent=11 // pred_fallthru
          _
      $region12: #{tpu_custom_call.1} parent=5 // pred_fallthru
        _
      %p121 = scmp.lt.s32.totalorder %s14, 2
      // Predicated region
      $region17: #{tpu_custom_call.1} parent=5 // pred_check
        %p122 = pneg %p121
      $region18: #{tpu_custom_call.1} parent=5 // pred_check_branch
        %124 = sbr.rel (%p122) target = $region20
      $region19: #{tpu_custom_call.1} parent=5 // pred_region
        // Predicated region
        $region21: #{tpu_custom_call.1} parent=19 // pred_check
          %p125 = pneg %p48
        $region22: #{tpu_custom_call.1} parent=19 // pred_check_branch
          %127 = sbr.rel (%p125) target = $region24
        $region23: #{tpu_custom_call.1} parent=19 // pred_region
          %s128 = sand.u32 %s38, 1
          %s129 = scalar_lea.sflag [#allocation3], %s128
          %s130 = sand.u32 %s38, 1
          %s131 = smul.addr %s130, 8
          %s132 = scalar_lea.vmem [#allocation2], %s131
          %s133 = smul.u32 2, %s22
          %135 = vsyncadd %s129, 0
          %s136 = smul.addr %s21, 2
          %s137 = sadd.s32 %s133, %s136
          %s138 = smul.addr %s137, 4
          %s139 = scalar_lea.hbm %s0, %s138
          %s141 = sshll.u32 %s139, 4
          %s142 = int_to_ptr.hbm [resolvable:$true] %s141
          %s143 = sshll.u32 %s132, 4
          %s144 = int_to_ptr.vmem [resolvable:$true] %s143
          %146 = dma.hbm_to_vmem [thread:$0]  %s142, 128, %s144, %s129
        $region24: #{tpu_custom_call.1} parent=19 // pred_fallthru
          _
      $region20: #{tpu_custom_call.1} parent=5 // pred_fallthru
        _
      %p147 = scmp.le.s32.totalorder 1, %s14
      %p148 = scmp.lt.s32.totalorder %s14, 3
      %p149 = pnand %p147, %p148
      %p150 = pneg %p149
      // Predicated region
      $region25: #{tpu_custom_call.1} parent=5 // pred_check
        _
      $region26: #{tpu_custom_call.1} parent=5 // pred_check_branch
        %152 = sbr.rel (%p149) target = $region28
      $region27: #{tpu_custom_call.1} parent=5 // pred_region
        %s153 = ssub.s32 %s14, 1
        %s154 = sand.u32 %s41, 1
        %s155 = scalar_lea.sflag [#allocation3], %s154
        %s156 = sand.u32 %s41, 1
        %s157 = smul.addr %s156, 8
        %s158 = scalar_lea.vmem [#allocation2], %s157
        // Predicated region
        $region29: #{tpu_custom_call.1} parent=27 // pred_check
          %p159 = pneg %p54
        $region30: #{tpu_custom_call.1} parent=27 // pred_check_branch
          %161 = sbr.rel (%p159) target = $region32
        $region31: #{tpu_custom_call.1} parent=27 // pred_region
          %163 = dma.done %s155, 128
        $region32: #{tpu_custom_call.1} parent=27 // pred_fallthru
          _
        %s164 = sand.u32 %s41, 1
        %s165 = scalar_lea.sflag [#allocation3], %s164
        %s166 = sand.u32 %s41, 1
        %s167 = smul.addr %s166, 8
        %s168 = scalar_lea.vmem [#allocation2], %s167
        %p169 = pneg %p54
        %p170 = pneg %p51
        %p171 = pneg %p75
        %p172 = pneg %p72
        %p173 = pneg %p103
        %p174 = pneg %p100
        %s175 = sand.u32 %s90, 1
        %s176 = scalar_lea.sflag [#allocation4], %s175
        %s177 = sand.u32 %s90, 1
        %s178 = smul.addr %s177, 8
        %s179 = scalar_lea.vmem [#allocation5], %s178
        %s180 = smul.u32 2, %s24
        %s181 = smul.u32 2, %s24
        %v182 = vld [vmem:[%s158] sm:$0xff]
        %v183 = vld [vmem:[%s1] sm:$0xf]
        %185 = vset.pattern.permute.xlu0 0
        %186 = vperm.xlu0 %185, %v183
        %v187 = vpop.permute.xlu0 %186
        %v189 = vunpack.c.l.s4 839922192
        %v190 = vunpack.c.0.s8 %v189
        %v191 = vperm.slane %v187, %v190
        %v193 = vadd.f32 %v182, %v191
        %194 = vst [vmem:[%s179] sm:$0xff] %v193
        %s195 = sand.u32 %s90, 1
        %s196 = scalar_lea.sflag [#allocation4], %s195
        %s197 = sand.u32 %s90, 1
        %s198 = smul.addr %s197, 8
        %s199 = scalar_lea.vmem [#allocation5], %s198
        // Predicated region
        $region33: #{tpu_custom_call.1} parent=27 // pred_check
          %p200 = pneg %p100
        $region34: #{tpu_custom_call.1} parent=27 // pred_check_branch
          %202 = sbr.rel (%p200) target = $region36
        $region35: #{tpu_custom_call.1} parent=27 // pred_region
          %s203 = smul.u32 2, %s24
          %205 = vsyncadd %s196, 0
          %s206 = smul.addr %s23, 2
          %s207 = sadd.s32 %s203, %s206
          %s208 = smul.addr %s207, 4
          %s209 = scalar_lea.hbm %s2, %s208
          %s211 = sshll.u32 %s199, 4
          %s212 = int_to_ptr.vmem [resolvable:$true] %s211
          %s213 = sshll.u32 %s209, 4
          %s214 = int_to_ptr.hbm [resolvable:$true] %s213
          %216 = dma.vmem_to_hbm [thread:$0]  %s212, 128, %s214, %s196
        $region36: #{tpu_custom_call.1} parent=27 // pred_fallthru
          _
      $region28: #{tpu_custom_call.1} parent=5 // pred_fallthru
        _
      %p217 = scmp.le.s32.totalorder 2, %s14
      // Predicated region
      $region37: #{tpu_custom_call.1} parent=5 // pred_check
        %p218 = pneg %p217
      $region38: #{tpu_custom_call.1} parent=5 // pred_check_branch
        %220 = sbr.rel (%p218) target = $region40
      $region39: #{tpu_custom_call.1} parent=5 // pred_region
        %s221 = ssub.s32 %s14, 2
        // Predicated region
        $region41: #{tpu_custom_call.1} parent=39 // pred_check
          %p222 = pneg %p106
        $region42: #{tpu_custom_call.1} parent=39 // pred_check_branch
          %224 = sbr.rel (%p222) target = $region44
        $region43: #{tpu_custom_call.1} parent=39 // pred_region
          %s225 = sand.u32 %s91, 1
          %s226 = scalar_lea.sflag [#allocation4], %s225
          %s227 = sand.u32 %s91, 1
          %s228 = smul.addr %s227, 8
          %s229 = scalar_lea.vmem [#allocation5], %s228
          %231 = dma.done %s226, 128
        $region44: #{tpu_custom_call.1} parent=39 // pred_fallthru
          _
      $region40: #{tpu_custom_call.1} parent=5 // pred_fallthru
        _
    $region6: #{tpu_custom_call.1} parent=1 // loop_footer
      %s18 = sadd.s32 1, %s14
    $region7: #{tpu_custom_call.1} parent=1 // loop_footer_branch
      %13 = sbr.rel target = $region3
    $region8: #{tpu_custom_call.1} parent=1 // loop_exit
      _
    %232 = vsyncpa [#allocation3], 1
    %s233 = scalar_lea.sflag [#allocation3], 1
    %234 = vsyncpa %s233, 1
    %235 = vsyncpa [#allocation4], 1
    %s236 = scalar_lea.sflag [#allocation4], 1
    %237 = vsyncpa %s236, 1

</llo_original>
